<compile_context>
chip_gen: v7x
topology: tpu7x:2x2x1
jax: 0.10.0
libtpu: 0.0.40
codegen_flags: <defaults>
</compile_context>

<pallas_src>
import functools

import numpy as np
import jax
import jax.numpy as jnp
from jax import lax
from jax.experimental import pallas as pl
from jax.experimental.pallas import tpu as pltpu

BN_EPS = 1e-5


def _softmask_kernel(w_ref, gamma_ref, beta_ref, ir_ref, vi_ref, out_ref, *, W):
    """Fused Conv2d(2->2, 3x3, pad=1) -> BatchNorm2d (batch stats) -> Sigmoid.

    w_ref:         (36,)  flattened conv weight (co, ci, kh, kw), SMEM
    gamma_ref:     (2,)   BN weight, SMEM
    beta_ref:      (2,)   BN bias, SMEM
    ir_ref/vi_ref: (N, H*W) float32, VMEM (flattened spatial, lane-dense)
    out_ref:       (N, 2*H*W) float32, VMEM
    """
    N, HW = ir_ref.shape

    # Border-validity masks.  With grid=(1,) these are computed exactly once; if the
    # kernel is ever tiled over a grid, hoist them into step-0 scratch (or pass a
    # (1, HW) mask row as a VMEM input) so the iota / %W / compares are not redone
    # every grid step.
    pos = lax.broadcasted_iota(jnp.int32, (N, HW), 1)
    ww = pos % W                        # cheap: W is a power of two here
    not_first_col = ww != 0             # a dw = -1 tap is valid at this pixel
    not_last_col = ww != (W - 1)        # a dw = +1 tap is valid at this pixel
    ok_up = pos >= W                    # a dh = -1 tap is valid (h > 0)
    ok_down = pos < (HW - W)            # a dh = +1 tap is valid (h < H-1)

    # ---- convolution: roll-based taps FMA'd straight into two accumulators ----
    # Conv bias intentionally omitted: it cancels exactly under batch-stat BN.
    acc0 = None   # pre-BN conv result, output channel 0
    acc1 = None   # pre-BN conv result, output channel 1
    for ci, x_ref in enumerate((ir_ref, vi_ref)):
        x = x_ref[...]
        # dw-shifted slabs; column mask applied once per (ci, dw).
        c_m1 = jnp.where(not_first_col, pltpu.roll(x, 1, axis=1), 0.0)       # dw = -1
        c_p1 = jnp.where(not_last_col, pltpu.roll(x, HW - 1, axis=1), 0.0)   # dw = +1
        cols = (c_m1, x, c_p1)                                               # kw = 0,1,2

        # kh = 0,1,2  <->  dh = -1,0,+1.  Rolling by a multiple of W preserves each
        # pixel's column coordinate (W | HW), so the column masks stay valid; rows
        # that wrap around the image are zeroed by the per-dh row mask applied to
        # the dh partial sums (once per output channel, not per tap).
        for kh, (dh_shift, row_mask) in enumerate(
                ((W, ok_up), (0, None), (HW - W, ok_down))):
            p0 = None
            p1 = None
            for kw in range(3):
                t = cols[kw] if dh_shift == 0 else pltpu.roll(cols[kw], dh_shift, axis=1)
                j = ci * 9 + kh * 3 + kw          # flattened (ci, kh, kw)
                t0 = w_ref[j] * t
                t1 = w_ref[18 + j] * t
                p0 = t0 if p0 is None else p0 + t0
                p1 = t1 if p1 is None else p1 + t1
            if row_mask is not None:
                p0 = jnp.where(row_mask, p0, 0.0)
                p1 = jnp.where(row_mask, p1, 0.0)
            acc0 = p0 if acc0 is None else acc0 + p0
            acc1 = p1 if acc1 is None else acc1 + p1

    # ---- BatchNorm (training-mode batch statistics) + Sigmoid, per channel ----
    # Two-pass statistics on the resident accumulator: var = E[(x - mean)^2]
    # (no E[x^2] - mean^2 cancellation), biased variance, eps = 1e-5.
    inv_cnt = 1.0 / float(N * HW)
    for co, acc in enumerate((acc0, acc1)):
        mean = jnp.sum(acc) * inv_cnt
        d = acc - mean
        var = jnp.sum(d * d) * inv_cnt
        scale = lax.rsqrt(var + BN_EPS) * gamma_ref[co]
        y = d * scale + beta_ref[co]
        # sigmoid(y) == 0.5 * tanh(0.5 * y) + 0.5  (single EUP op, no VALU divide)
        out_ref[:, co * HW:(co + 1) * HW] = 0.5 * jnp.tanh(0.5 * y) + 0.5


def soft_mask_forward(ir, vi, w, b, gamma, beta):
    """ir, vi: (N, 1, H, W) float32  ->  mask: (N, 2, H, W) float32.

    `b` (conv bias) is accepted for interface fidelity but is mathematically
    eliminated by the training-mode BatchNorm that follows (a per-channel constant
    cancels in x - mean(x)), so it is not passed to the kernel.
    """
    del b
    N, _, H, W = ir.shape
    HW = H * W
    # Contiguous (free) reshapes -- no concat / pad / transpose on the XLA side.
    ir_f = jnp.asarray(ir, jnp.float32).reshape(N, HW)
    vi_f = jnp.asarray(vi, jnp.float32).reshape(N, HW)
    w_flat = jnp.asarray(w, jnp.float32).reshape(-1)

    kernel = functools.partial(_softmask_kernel, W=W)

    # NOTE(production sizes): BatchNorm statistics are global over (N, H, W), so any
    # grid tiling needs a cross-block reduction -- accumulate per-channel sum /
    # sum-of-squares in persistent scratch across an "arbitrary" reduction axis and
    # finalize (normalize + sigmoid) in the last step, or use a two-phase design
    # (single-pass over HBM on v5e).  Independent axes should then be "parallel" so
    # v7x's second TensorCore is used; keep the sublane block dim a multiple of 8,
    # the lane extent >= 512 for unmasked vst, scratch block-sized, and the total
    # VMEM budget <= ~48 MiB for v7x's 64 MiB.  At 2x2x16x16 a single full-array
    # block is already at the fixed-overhead floor, so grid=(1,) is used here.
    grid_spec = pltpu.PrefetchScalarGridSpec(
        num_scalar_prefetch=0,
        grid=(1,),
        in_specs=[
            pl.BlockSpec(memory_space=pltpu.SMEM),        # conv weight (36,)
            pl.BlockSpec(memory_space=pltpu.SMEM),        # BN gamma (2,)
            pl.BlockSpec(memory_space=pltpu.SMEM),        # BN beta (2,)
            pl.BlockSpec((N, HW), lambda i: (0, 0)),      # ir (VMEM, lane-dense)
            pl.BlockSpec((N, HW), lambda i: (0, 0)),      # vi (VMEM, lane-dense)
        ],
        out_specs=pl.BlockSpec((N, 2 * HW), lambda i: (0, 0)),
    )

    out = pl.pallas_call(
        kernel,
        out_shape=jax.ShapeDtypeStruct((N, 2 * HW), jnp.float32),
        grid_spec=grid_spec,
        compiler_params=pltpu.CompilerParams(
            dimension_semantics=("arbitrary",),
            vmem_limit_bytes=48 * 1024 * 1024,   # explicit budget; fits v7x's 64 MiB
        ),
    )(w_flat,
      jnp.asarray(gamma, jnp.float32),
      jnp.asarray(beta, jnp.float32),
      ir_f, vi_f)

    # (N, 2*H*W) -> (N, 2, H, W): contiguous reshape, no data movement.
    return out.reshape(N, 2, H, W)


def _reference_forward(ir, vi, w, b, gamma, beta):
    """Pure numpy reference with identical math (for verification)."""
    src = np.concatenate([np.asarray(ir), np.asarray(vi)], axis=1).astype(np.float32)
    N, C, H, W = src.shape
    srcp = np.pad(src, ((0, 0), (0, 0), (1, 1), (1, 1)))
    w = np.asarray(w, np.float32)
    b = np.asarray(b, np.float32)
    out = np.zeros((N, 2, H, W), np.float32)
    for co in range(2):
        acc = np.full((N, H, W), b[co], np.float32)
        for ci in range(2):
            for kh in range(3):
                for kw in range(3):
                    acc += w[co, ci, kh, kw] * srcp[:, ci, kh:kh + H, kw:kw + W]
        out[:, co] = acc
    mean = out.mean(axis=(0, 2, 3), keepdims=True)
    var = out.var(axis=(0, 2, 3), keepdims=True)  # biased, as in BN training forward
    y = (out - mean) / np.sqrt(var + BN_EPS)
    y = y * np.asarray(gamma, np.float32).reshape(1, 2, 1, 1) \
        + np.asarray(beta, np.float32).reshape(1, 2, 1, 1)
    return 1.0 / (1.0 + np.exp(-y))


if __name__ == "__main__":
    key = jax.random.PRNGKey(0)
    k_ir, k_vi, k_w, k_b = jax.random.split(key, 4)

    N, H, W = 2, 16, 16
    ir = jax.random.normal(k_ir, (N, 1, H, W), jnp.float32)
    vi = jax.random.normal(k_vi, (N, 1, H, W), jnp.float32)

    # Deterministic synthetic parameters (Conv2d(2, 2, 3, 3) + BatchNorm2d(2) defaults).
    w = 0.1 * jax.random.normal(k_w, (2, 2, 3, 3), jnp.float32)
    b = 0.1 * jax.random.normal(k_b, (2,), jnp.float32)
    gamma = jnp.ones((2,), jnp.float32)   # BN weight init
    beta = jnp.zeros((2,), jnp.float32)   # BN bias init

    mask = soft_mask_forward(ir, vi, w, b, gamma, beta)
    mask = jax.block_until_ready(mask)

    ref = _reference_forward(ir, vi, w, b, gamma, beta)
    np.testing.assert_allclose(np.asarray(mask), ref, rtol=1e-4, atol=2e-5)

    print("KERNEL_OK")
</pallas_src>

<mosaic_0001>
module attributes {stable_mosaic.version = 11 : i64} {
  func.func @_softmask_kernel(%arg0: i32, %arg1: memref<36xf32, #tpu.memory_space<smem>>, %arg2: memref<2xf32, #tpu.memory_space<smem>>, %arg3: memref<2xf32, #tpu.memory_space<smem>>, %arg4: memref<2x256xf32, #tpu.memory_space<vmem>>, %arg5: memref<2x256xf32, #tpu.memory_space<vmem>>, %arg6: memref<2x512xf32, #tpu.memory_space<vmem>>) attributes {dimension_semantics = [#tpu.dimension_semantics<arbitrary>], iteration_bounds = array<i64: 1>, scalar_prefetch = 0 : i64, scratch_operands = 0 : i64, tpu.core_type = #tpu.core_type<tc>, window_params = [{transform_indices = @transform_0, window_bounds = array<i64: 36>}, {transform_indices = @transform_1, window_bounds = array<i64: 2>}, {transform_indices = @transform_2, window_bounds = array<i64: 2>}, {pipeline_mode = #tpu.pipeline_mode<synchronous>, transform_indices = @transform_3, window_bounds = array<i64: 2, 256>}, {pipeline_mode = #tpu.pipeline_mode<synchronous>, transform_indices = @transform_4, window_bounds = array<i64: 2, 256>}, {pipeline_mode = #tpu.pipeline_mode<synchronous>, transform_indices = @transform_5, window_bounds = array<i64: 2, 512>}]} {
    %0 = tpu.iota {dimensions = array<i32: 1>} : vector<2x256xi32>
    %c16_i32 = arith.constant 16 : i32
    %c0_i32 = arith.constant 0 : i32
    %1 = arith.cmpi eq, %c16_i32, %c0_i32 : i32
    %c1_i32 = arith.constant 1 : i32
    %2 = arith.select %1, %c1_i32, %c16_i32 : i32
    %3 = vector.broadcast %2 : i32 to vector<2x256xi32>
    %4 = arith.remsi %0, %3 : vector<2x256xi32>
    %c0_i32_0 = arith.constant 0 : i32
    %5 = vector.broadcast %c0_i32_0 : i32 to vector<2x256xi32>
    %6 = arith.cmpi ne, %4, %5 : vector<2x256xi32>
    %c0_i32_1 = arith.constant 0 : i32
    %7 = vector.broadcast %c0_i32_1 : i32 to vector<2x256xi32>
    %8 = arith.cmpi slt, %4, %7 : vector<2x256xi32>
    %c0_i32_2 = arith.constant 0 : i32
    %9 = arith.cmpi slt, %2, %c0_i32_2 : i32
    %10 = vector.broadcast %9 : i1 to vector<2x256xi1>
    %11 = vector.broadcast %10 : vector<2x256xi1> to vector<2x256xi1>
    %12 = arith.xori %8, %11 : vector<2x256xi1>
    %13 = arith.andi %12, %6 : vector<2x256xi1>
    %14 = vector.broadcast %2 : i32 to vector<2x256xi32>
    %15 = arith.addi %4, %14 : vector<2x256xi32>
    %16 = arith.select %13, %15, %4 : vector<2x256xi1>, vector<2x256xi32>
    %c0_i32_3 = arith.constant 0 : i32
    %17 = vector.broadcast %c0_i32_3 : i32 to vector<2x256xi32>
    %18 = arith.cmpi ne, %16, %17 : vector<2x256xi32>
    %c15_i32 = arith.constant 15 : i32
    %19 = vector.broadcast %c15_i32 : i32 to vector<2x256xi32>
    %20 = arith.cmpi ne, %16, %19 : vector<2x256xi32>
    %c16_i32_4 = arith.constant 16 : i32
    %21 = vector.broadcast %c16_i32_4 : i32 to vector<2x256xi32>
    %22 = arith.cmpi sge, %0, %21 : vector<2x256xi32>
    %c240_i32 = arith.constant 240 : i32
    %23 = vector.broadcast %c240_i32 : i32 to vector<2x256xi32>
    %24 = arith.cmpi slt, %0, %23 : vector<2x256xi32>
    %c0 = arith.constant 0 : index
    %c0_5 = arith.constant 0 : index
    %25 = vector.load %arg4[%c0, %c0_5] : memref<2x256xf32, #tpu.memory_space<vmem>>, vector<2x256xf32>
    %c1_i32_6 = arith.constant 1 : i32
    %26 = tpu.dynamic_rotate %25 by %c1_i32_6 dim 1 : vector<2x256xf32>, i32 -> vector<2x256xf32>
    %cst = arith.constant 0.000000e+00 : f32
    %27 = vector.broadcast %cst : f32 to vector<2x256xf32>
    %28 = arith.select %18, %26, %27 : vector<2x256xi1>, vector<2x256xf32>
    %c255_i32 = arith.constant 255 : i32
    %29 = tpu.dynamic_rotate %25 by %c255_i32 dim 1 : vector<2x256xf32>, i32 -> vector<2x256xf32>
    %cst_7 = arith.constant 0.000000e+00 : f32
    %30 = vector.broadcast %cst_7 : f32 to vector<2x256xf32>
    %31 = arith.select %20, %29, %30 : vector<2x256xi1>, vector<2x256xf32>
    %c16_i32_8 = arith.constant 16 : i32
    %32 = tpu.dynamic_rotate %28 by %c16_i32_8 dim 1 : vector<2x256xf32>, i32 -> vector<2x256xf32>
    %c0_9 = arith.constant 0 : index
    %33 = memref.load %arg1[%c0_9] : memref<36xf32, #tpu.memory_space<smem>>
    %34 = vector.broadcast %33 : f32 to vector<2x256xf32>
    %35 = arith.mulf %34, %32 : vector<2x256xf32>
    %c18 = arith.constant 18 : index
    %36 = memref.load %arg1[%c18] : memref<36xf32, #tpu.memory_space<smem>>
    %37 = vector.broadcast %36 : f32 to vector<2x256xf32>
    %38 = arith.mulf %37, %32 : vector<2x256xf32>
    %c16_i32_10 = arith.constant 16 : i32
    %39 = tpu.dynamic_rotate %25 by %c16_i32_10 dim 1 : vector<2x256xf32>, i32 -> vector<2x256xf32>
    %c1 = arith.constant 1 : index
    %40 = memref.load %arg1[%c1] : memref<36xf32, #tpu.memory_space<smem>>
    %41 = vector.broadcast %40 : f32 to vector<2x256xf32>
    %42 = arith.mulf %41, %39 : vector<2x256xf32>
    %c19 = arith.constant 19 : index
    %43 = memref.load %arg1[%c19] : memref<36xf32, #tpu.memory_space<smem>>
    %44 = vector.broadcast %43 : f32 to vector<2x256xf32>
    %45 = arith.mulf %44, %39 : vector<2x256xf32>
    %46 = arith.addf %35, %42 : vector<2x256xf32>
    %47 = arith.addf %38, %45 : vector<2x256xf32>
    %c16_i32_11 = arith.constant 16 : i32
    %48 = tpu.dynamic_rotate %31 by %c16_i32_11 dim 1 : vector<2x256xf32>, i32 -> vector<2x256xf32>
    %c2 = arith.constant 2 : index
    %49 = memref.load %arg1[%c2] : memref<36xf32, #tpu.memory_space<smem>>
    %50 = vector.broadcast %49 : f32 to vector<2x256xf32>
    %51 = arith.mulf %50, %48 : vector<2x256xf32>
    %c20 = arith.constant 20 : index
    %52 = memref.load %arg1[%c20] : memref<36xf32, #tpu.memory_space<smem>>
    %53 = vector.broadcast %52 : f32 to vector<2x256xf32>
    %54 = arith.mulf %53, %48 : vector<2x256xf32>
    %55 = arith.addf %46, %51 : vector<2x256xf32>
    %56 = arith.addf %47, %54 : vector<2x256xf32>
    %cst_12 = arith.constant 0.000000e+00 : f32
    %57 = vector.broadcast %cst_12 : f32 to vector<2x256xf32>
    %58 = arith.select %22, %55, %57 : vector<2x256xi1>, vector<2x256xf32>
    %cst_13 = arith.constant 0.000000e+00 : f32
    %59 = vector.broadcast %cst_13 : f32 to vector<2x256xf32>
    %60 = arith.select %22, %56, %59 : vector<2x256xi1>, vector<2x256xf32>
    %c3 = arith.constant 3 : index
    %61 = memref.load %arg1[%c3] : memref<36xf32, #tpu.memory_space<smem>>
    %62 = vector.broadcast %61 : f32 to vector<2x256xf32>
    %63 = arith.mulf %62, %28 : vector<2x256xf32>
    %c21 = arith.constant 21 : index
    %64 = memref.load %arg1[%c21] : memref<36xf32, #tpu.memory_space<smem>>
    %65 = vector.broadcast %64 : f32 to vector<2x256xf32>
    %66 = arith.mulf %65, %28 : vector<2x256xf32>
    %c4 = arith.constant 4 : index
    %67 = memref.load %arg1[%c4] : memref<36xf32, #tpu.memory_space<smem>>
    %68 = vector.broadcast %67 : f32 to vector<2x256xf32>
    %69 = arith.mulf %68, %25 : vector<2x256xf32>
    %c22 = arith.constant 22 : index
    %70 = memref.load %arg1[%c22] : memref<36xf32, #tpu.memory_space<smem>>
    %71 = vector.broadcast %70 : f32 to vector<2x256xf32>
    %72 = arith.mulf %71, %25 : vector<2x256xf32>
    %73 = arith.addf %63, %69 : vector<2x256xf32>
    %74 = arith.addf %66, %72 : vector<2x256xf32>
    %c5 = arith.constant 5 : index
    %75 = memref.load %arg1[%c5] : memref<36xf32, #tpu.memory_space<smem>>
    %76 = vector.broadcast %75 : f32 to vector<2x256xf32>
    %77 = arith.mulf %76, %31 : vector<2x256xf32>
    %c23 = arith.constant 23 : index
    %78 = memref.load %arg1[%c23] : memref<36xf32, #tpu.memory_space<smem>>
    %79 = vector.broadcast %78 : f32 to vector<2x256xf32>
    %80 = arith.mulf %79, %31 : vector<2x256xf32>
    %81 = arith.addf %73, %77 : vector<2x256xf32>
    %82 = arith.addf %74, %80 : vector<2x256xf32>
    %83 = arith.addf %58, %81 : vector<2x256xf32>
    %84 = arith.addf %60, %82 : vector<2x256xf32>
    %c240_i32_14 = arith.constant 240 : i32
    %85 = tpu.dynamic_rotate %28 by %c240_i32_14 dim 1 : vector<2x256xf32>, i32 -> vector<2x256xf32>
    %c6 = arith.constant 6 : index
    %86 = memref.load %arg1[%c6] : memref<36xf32, #tpu.memory_space<smem>>
    %87 = vector.broadcast %86 : f32 to vector<2x256xf32>
    %88 = arith.mulf %87, %85 : vector<2x256xf32>
    %c24 = arith.constant 24 : index
    %89 = memref.load %arg1[%c24] : memref<36xf32, #tpu.memory_space<smem>>
    %90 = vector.broadcast %89 : f32 to vector<2x256xf32>
    %91 = arith.mulf %90, %85 : vector<2x256xf32>
    %c240_i32_15 = arith.constant 240 : i32
    %92 = tpu.dynamic_rotate %25 by %c240_i32_15 dim 1 : vector<2x256xf32>, i32 -> vector<2x256xf32>
    %c7 = arith.constant 7 : index
    %93 = memref.load %arg1[%c7] : memref<36xf32, #tpu.memory_space<smem>>
    %94 = vector.broadcast %93 : f32 to vector<2x256xf32>
    %95 = arith.mulf %94, %92 : vector<2x256xf32>
    %c25 = arith.constant 25 : index
    %96 = memref.load %arg1[%c25] : memref<36xf32, #tpu.memory_space<smem>>
    %97 = vector.broadcast %96 : f32 to vector<2x256xf32>
    %98 = arith.mulf %97, %92 : vector<2x256xf32>
    %99 = arith.addf %88, %95 : vector<2x256xf32>
    %100 = arith.addf %91, %98 : vector<2x256xf32>
    %c240_i32_16 = arith.constant 240 : i32
    %101 = tpu.dynamic_rotate %31 by %c240_i32_16 dim 1 : vector<2x256xf32>, i32 -> vector<2x256xf32>
    %c8 = arith.constant 8 : index
    %102 = memref.load %arg1[%c8] : memref<36xf32, #tpu.memory_space<smem>>
    %103 = vector.broadcast %102 : f32 to vector<2x256xf32>
    %104 = arith.mulf %103, %101 : vector<2x256xf32>
    %c26 = arith.constant 26 : index
    %105 = memref.load %arg1[%c26] : memref<36xf32, #tpu.memory_space<smem>>
    %106 = vector.broadcast %105 : f32 to vector<2x256xf32>
    %107 = arith.mulf %106, %101 : vector<2x256xf32>
    %108 = arith.addf %99, %104 : vector<2x256xf32>
    %109 = arith.addf %100, %107 : vector<2x256xf32>
    %cst_17 = arith.constant 0.000000e+00 : f32
    %110 = vector.broadcast %cst_17 : f32 to vector<2x256xf32>
    %111 = arith.select %24, %108, %110 : vector<2x256xi1>, vector<2x256xf32>
    %cst_18 = arith.constant 0.000000e+00 : f32
    %112 = vector.broadcast %cst_18 : f32 to vector<2x256xf32>
    %113 = arith.select %24, %109, %112 : vector<2x256xi1>, vector<2x256xf32>
    %114 = arith.addf %83, %111 : vector<2x256xf32>
    %115 = arith.addf %84, %113 : vector<2x256xf32>
    %c0_19 = arith.constant 0 : index
    %c0_20 = arith.constant 0 : index
    %116 = vector.load %arg5[%c0_19, %c0_20] : memref<2x256xf32, #tpu.memory_space<vmem>>, vector<2x256xf32>
    %c1_i32_21 = arith.constant 1 : i32
    %117 = tpu.dynamic_rotate %116 by %c1_i32_21 dim 1 : vector<2x256xf32>, i32 -> vector<2x256xf32>
    %cst_22 = arith.constant 0.000000e+00 : f32
    %118 = vector.broadcast %cst_22 : f32 to vector<2x256xf32>
    %119 = arith.select %18, %117, %118 : vector<2x256xi1>, vector<2x256xf32>
    %c255_i32_23 = arith.constant 255 : i32
    %120 = tpu.dynamic_rotate %116 by %c255_i32_23 dim 1 : vector<2x256xf32>, i32 -> vector<2x256xf32>
    %cst_24 = arith.constant 0.000000e+00 : f32
    %121 = vector.broadcast %cst_24 : f32 to vector<2x256xf32>
    %122 = arith.select %20, %120, %121 : vector<2x256xi1>, vector<2x256xf32>
    %c16_i32_25 = arith.constant 16 : i32
    %123 = tpu.dynamic_rotate %119 by %c16_i32_25 dim 1 : vector<2x256xf32>, i32 -> vector<2x256xf32>
    %c9 = arith.constant 9 : index
    %124 = memref.load %arg1[%c9] : memref<36xf32, #tpu.memory_space<smem>>
    %125 = vector.broadcast %124 : f32 to vector<2x256xf32>
    %126 = arith.mulf %125, %123 : vector<2x256xf32>
    %c27 = arith.constant 27 : index
    %127 = memref.load %arg1[%c27] : memref<36xf32, #tpu.memory_space<smem>>
    %128 = vector.broadcast %127 : f32 to vector<2x256xf32>
    %129 = arith.mulf %128, %123 : vector<2x256xf32>
    %c16_i32_26 = arith.constant 16 : i32
    %130 = tpu.dynamic_rotate %116 by %c16_i32_26 dim 1 : vector<2x256xf32>, i32 -> vector<2x256xf32>
    %c10 = arith.constant 10 : index
    %131 = memref.load %arg1[%c10] : memref<36xf32, #tpu.memory_space<smem>>
    %132 = vector.broadcast %131 : f32 to vector<2x256xf32>
    %133 = arith.mulf %132, %130 : vector<2x256xf32>
    %c28 = arith.constant 28 : index
    %134 = memref.load %arg1[%c28] : memref<36xf32, #tpu.memory_space<smem>>
    %135 = vector.broadcast %134 : f32 to vector<2x256xf32>
    %136 = arith.mulf %135, %130 : vector<2x256xf32>
    %137 = arith.addf %126, %133 : vector<2x256xf32>
    %138 = arith.addf %129, %136 : vector<2x256xf32>
    %c16_i32_27 = arith.constant 16 : i32
    %139 = tpu.dynamic_rotate %122 by %c16_i32_27 dim 1 : vector<2x256xf32>, i32 -> vector<2x256xf32>
    %c11 = arith.constant 11 : index
    %140 = memref.load %arg1[%c11] : memref<36xf32, #tpu.memory_space<smem>>
    %141 = vector.broadcast %140 : f32 to vector<2x256xf32>
    %142 = arith.mulf %141, %139 : vector<2x256xf32>
    %c29 = arith.constant 29 : index
    %143 = memref.load %arg1[%c29] : memref<36xf32, #tpu.memory_space<smem>>
    %144 = vector.broadcast %143 : f32 to vector<2x256xf32>
    %145 = arith.mulf %144, %139 : vector<2x256xf32>
    %146 = arith.addf %137, %142 : vector<2x256xf32>
    %147 = arith.addf %138, %145 : vector<2x256xf32>
    %cst_28 = arith.constant 0.000000e+00 : f32
    %148 = vector.broadcast %cst_28 : f32 to vector<2x256xf32>
    %149 = arith.select %22, %146, %148 : vector<2x256xi1>, vector<2x256xf32>
    %cst_29 = arith.constant 0.000000e+00 : f32
    %150 = vector.broadcast %cst_29 : f32 to vector<2x256xf32>
    %151 = arith.select %22, %147, %150 : vector<2x256xi1>, vector<2x256xf32>
    %152 = arith.addf %114, %149 : vector<2x256xf32>
    %153 = arith.addf %115, %151 : vector<2x256xf32>
    %c12 = arith.constant 12 : index
    %154 = memref.load %arg1[%c12] : memref<36xf32, #tpu.memory_space<smem>>
    %155 = vector.broadcast %154 : f32 to vector<2x256xf32>
    %156 = arith.mulf %155, %119 : vector<2x256xf32>
    %c30 = arith.constant 30 : index
    %157 = memref.load %arg1[%c30] : memref<36xf32, #tpu.memory_space<smem>>
    %158 = vector.broadcast %157 : f32 to vector<2x256xf32>
    %159 = arith.mulf %158, %119 : vector<2x256xf32>
    %c13 = arith.constant 13 : index
    %160 = memref.load %arg1[%c13] : memref<36xf32, #tpu.memory_space<smem>>
    %161 = vector.broadcast %160 : f32 to vector<2x256xf32>
    %162 = arith.mulf %161, %116 : vector<2x256xf32>
    %c31 = arith.constant 31 : index
    %163 = memref.load %arg1[%c31] : memref<36xf32, #tpu.memory_space<smem>>
    %164 = vector.broadcast %163 : f32 to vector<2x256xf32>
    %165 = arith.mulf %164, %116 : vector<2x256xf32>
    %166 = arith.addf %156, %162 : vector<2x256xf32>
    %167 = arith.addf %159, %165 : vector<2x256xf32>
    %c14 = arith.constant 14 : index
    %168 = memref.load %arg1[%c14] : memref<36xf32, #tpu.memory_space<smem>>
    %169 = vector.broadcast %168 : f32 to vector<2x256xf32>
    %170 = arith.mulf %169, %122 : vector<2x256xf32>
    %c32 = arith.constant 32 : index
    %171 = memref.load %arg1[%c32] : memref<36xf32, #tpu.memory_space<smem>>
    %172 = vector.broadcast %171 : f32 to vector<2x256xf32>
    %173 = arith.mulf %172, %122 : vector<2x256xf32>
    %174 = arith.addf %166, %170 : vector<2x256xf32>
    %175 = arith.addf %167, %173 : vector<2x256xf32>
    %176 = arith.addf %152, %174 : vector<2x256xf32>
    %177 = arith.addf %153, %175 : vector<2x256xf32>
    %c240_i32_30 = arith.constant 240 : i32
    %178 = tpu.dynamic_rotate %119 by %c240_i32_30 dim 1 : vector<2x256xf32>, i32 -> vector<2x256xf32>
    %c15 = arith.constant 15 : index
    %179 = memref.load %arg1[%c15] : memref<36xf32, #tpu.memory_space<smem>>
    %180 = vector.broadcast %179 : f32 to vector<2x256xf32>
    %181 = arith.mulf %180, %178 : vector<2x256xf32>
    %c33 = arith.constant 33 : index
    %182 = memref.load %arg1[%c33] : memref<36xf32, #tpu.memory_space<smem>>
    %183 = vector.broadcast %182 : f32 to vector<2x256xf32>
    %184 = arith.mulf %183, %178 : vector<2x256xf32>
    %c240_i32_31 = arith.constant 240 : i32
    %185 = tpu.dynamic_rotate %116 by %c240_i32_31 dim 1 : vector<2x256xf32>, i32 -> vector<2x256xf32>
    %c16 = arith.constant 16 : index
    %186 = memref.load %arg1[%c16] : memref<36xf32, #tpu.memory_space<smem>>
    %187 = vector.broadcast %186 : f32 to vector<2x256xf32>
    %188 = arith.mulf %187, %185 : vector<2x256xf32>
    %c34 = arith.constant 34 : index
    %189 = memref.load %arg1[%c34] : memref<36xf32, #tpu.memory_space<smem>>
    %190 = vector.broadcast %189 : f32 to vector<2x256xf32>
    %191 = arith.mulf %190, %185 : vector<2x256xf32>
    %192 = arith.addf %181, %188 : vector<2x256xf32>
    %193 = arith.addf %184, %191 : vector<2x256xf32>
    %c240_i32_32 = arith.constant 240 : i32
    %194 = tpu.dynamic_rotate %122 by %c240_i32_32 dim 1 : vector<2x256xf32>, i32 -> vector<2x256xf32>
    %c17 = arith.constant 17 : index
    %195 = memref.load %arg1[%c17] : memref<36xf32, #tpu.memory_space<smem>>
    %196 = vector.broadcast %195 : f32 to vector<2x256xf32>
    %197 = arith.mulf %196, %194 : vector<2x256xf32>
    %c35 = arith.constant 35 : index
    %198 = memref.load %arg1[%c35] : memref<36xf32, #tpu.memory_space<smem>>
    %199 = vector.broadcast %198 : f32 to vector<2x256xf32>
    %200 = arith.mulf %199, %194 : vector<2x256xf32>
    %201 = arith.addf %192, %197 : vector<2x256xf32>
    %202 = arith.addf %193, %200 : vector<2x256xf32>
    %cst_33 = arith.constant 0.000000e+00 : f32
    %203 = vector.broadcast %cst_33 : f32 to vector<2x256xf32>
    %204 = arith.select %24, %201, %203 : vector<2x256xi1>, vector<2x256xf32>
    %cst_34 = arith.constant 0.000000e+00 : f32
    %205 = vector.broadcast %cst_34 : f32 to vector<2x256xf32>
    %206 = arith.select %24, %202, %205 : vector<2x256xi1>, vector<2x256xf32>
    %207 = arith.addf %176, %204 : vector<2x256xf32>
    %208 = arith.addf %177, %206 : vector<2x256xf32>
    %209 = vector.shape_cast %207 : vector<2x256xf32> to vector<1x2x256xf32>
    %cst_35 = arith.constant dense<0.000000e+00> : vector<1xf32>
    %210 = vector.multi_reduction <add>, %209, %cst_35 [1, 2] : vector<1x2x256xf32> to vector<1xf32>
    %211 = vector.shape_cast %210 : vector<1xf32> to vector<1x1x1xf32>
    %212 = vector.extract %211[0, 0, 0] : f32 from vector<1x1x1xf32>
    %cst_36 = arith.constant 0.001953125 : f32
    %213 = arith.mulf %212, %cst_36 : f32
    %214 = vector.broadcast %213 : f32 to vector<2x256xf32>
    %215 = arith.subf %207, %214 : vector<2x256xf32>
    %216 = arith.mulf %215, %215 : vector<2x256xf32>
    %217 = vector.shape_cast %216 : vector<2x256xf32> to vector<1x2x256xf32>
    %cst_37 = arith.constant dense<0.000000e+00> : vector<1xf32>
    %218 = vector.multi_reduction <add>, %217, %cst_37 [1, 2] : vector<1x2x256xf32> to vector<1xf32>
    %219 = vector.shape_cast %218 : vector<1xf32> to vector<1x1x1xf32>
    %220 = vector.extract %219[0, 0, 0] : f32 from vector<1x1x1xf32>
    %cst_38 = arith.constant 0.001953125 : f32
    %221 = arith.mulf %220, %cst_38 : f32
    %cst_39 = arith.constant 9.99999974E-6 : f32
    %222 = arith.addf %221, %cst_39 : f32
    %223 = math.rsqrt %222 : f32
    %c0_40 = arith.constant 0 : index
    %224 = memref.load %arg2[%c0_40] : memref<2xf32, #tpu.memory_space<smem>>
    %225 = arith.mulf %223, %224 : f32
    %226 = vector.broadcast %225 : f32 to vector<2x256xf32>
    %227 = arith.mulf %215, %226 : vector<2x256xf32>
    %c0_41 = arith.constant 0 : index
    %228 = memref.load %arg3[%c0_41] : memref<2xf32, #tpu.memory_space<smem>>
    %229 = vector.broadcast %228 : f32 to vector<2x256xf32>
    %230 = arith.addf %227, %229 : vector<2x256xf32>
    %cst_42 = arith.constant 5.000000e-01 : f32
    %231 = vector.broadcast %cst_42 : f32 to vector<2x256xf32>
    %232 = arith.mulf %231, %230 : vector<2x256xf32>
    %233 = math.tanh %232 : vector<2x256xf32>
    %cst_43 = arith.constant 5.000000e-01 : f32
    %234 = vector.broadcast %cst_43 : f32 to vector<2x256xf32>
    %235 = arith.mulf %234, %233 : vector<2x256xf32>
    %cst_44 = arith.constant 5.000000e-01 : f32
    %236 = vector.broadcast %cst_44 : f32 to vector<2x256xf32>
    %237 = arith.addf %235, %236 : vector<2x256xf32>
    %c0_45 = arith.constant 0 : index
    %c0_46 = arith.constant 0 : index
    %238 = vector.load %arg6[%c0_45, %c0_46] : memref<2x512xf32, #tpu.memory_space<vmem>>, vector<2x256xf32>
    tpu.vector_store %arg6[%c0_45, %c0_46], %237 {strides = array<i32>} : memref<2x512xf32, #tpu.memory_space<vmem>>, vector<2x256xf32>,
    %239 = vector.shape_cast %208 : vector<2x256xf32> to vector<1x2x256xf32>
    %cst_47 = arith.constant dense<0.000000e+00> : vector<1xf32>
    %240 = vector.multi_reduction <add>, %239, %cst_47 [1, 2] : vector<1x2x256xf32> to vector<1xf32>
    %241 = vector.shape_cast %240 : vector<1xf32> to vector<1x1x1xf32>
    %242 = vector.extract %241[0, 0, 0] : f32 from vector<1x1x1xf32>
    %cst_48 = arith.constant 0.001953125 : f32
    %243 = arith.mulf %242, %cst_48 : f32
    %244 = vector.broadcast %243 : f32 to vector<2x256xf32>
    %245 = arith.subf %208, %244 : vector<2x256xf32>
    %246 = arith.mulf %245, %245 : vector<2x256xf32>
    %247 = vector.shape_cast %246 : vector<2x256xf32> to vector<1x2x256xf32>
    %cst_49 = arith.constant dense<0.000000e+00> : vector<1xf32>
    %248 = vector.multi_reduction <add>, %247, %cst_49 [1, 2] : vector<1x2x256xf32> to vector<1xf32>
    %249 = vector.shape_cast %248 : vector<1xf32> to vector<1x1x1xf32>
    %250 = vector.extract %249[0, 0, 0] : f32 from vector<1x1x1xf32>
    %cst_50 = arith.constant 0.001953125 : f32
    %251 = arith.mulf %250, %cst_50 : f32
    %cst_51 = arith.constant 9.99999974E-6 : f32
    %252 = arith.addf %251, %cst_51 : f32
    %253 = math.rsqrt %252 : f32
    %c1_52 = arith.constant 1 : index
    %254 = memref.load %arg2[%c1_52] : memref<2xf32, #tpu.memory_space<smem>>
    %255 = arith.mulf %253, %254 : f32
    %256 = vector.broadcast %255 : f32 to vector<2x256xf32>
    %257 = arith.mulf %245, %256 : vector<2x256xf32>
    %c1_53 = arith.constant 1 : index
    %258 = memref.load %arg3[%c1_53] : memref<2xf32, #tpu.memory_space<smem>>
    %259 = vector.broadcast %258 : f32 to vector<2x256xf32>
    %260 = arith.addf %257, %259 : vector<2x256xf32>
    %cst_54 = arith.constant 5.000000e-01 : f32
    %261 = vector.broadcast %cst_54 : f32 to vector<2x256xf32>
    %262 = arith.mulf %261, %260 : vector<2x256xf32>
    %263 = math.tanh %262 : vector<2x256xf32>
    %cst_55 = arith.constant 5.000000e-01 : f32
    %264 = vector.broadcast %cst_55 : f32 to vector<2x256xf32>
    %265 = arith.mulf %264, %263 : vector<2x256xf32>
    %cst_56 = arith.constant 5.000000e-01 : f32
    %266 = vector.broadcast %cst_56 : f32 to vector<2x256xf32>
    %267 = arith.addf %265, %266 : vector<2x256xf32>
    %c0_57 = arith.constant 0 : index
    %c256 = arith.constant 256 : index
    %268 = vector.load %arg6[%c0_57, %c256] : memref<2x512xf32, #tpu.memory_space<vmem>>, vector<2x256xf32>
    tpu.vector_store %arg6[%c0_57, %c256], %267 {strides = array<i32>} : memref<2x512xf32, #tpu.memory_space<vmem>>, vector<2x256xf32>,
    return
  }
  func.func @transform_0(%arg0: i32) -> i32 {
    %c0_i32 = arith.constant 0 : i32
    %c0_i32_0 = arith.constant 0 : i32
    return %c0_i32 : i32
  }
  func.func @transform_1(%arg0: i32) -> i32 {
    %c0_i32 = arith.constant 0 : i32
    %c0_i32_0 = arith.constant 0 : i32
    return %c0_i32 : i32
  }
  func.func @transform_2(%arg0: i32) -> i32 {
    %c0_i32 = arith.constant 0 : i32
    %c0_i32_0 = arith.constant 0 : i32
    return %c0_i32 : i32
  }
  func.func @transform_3(%arg0: i32) -> (i32, i32) {
    %c0_i32 = arith.constant 0 : i32
    %c0_i32_0 = arith.constant 0 : i32
    %c0_i32_1 = arith.constant 0 : i32
    return %c0_i32, %c0_i32_0 : i32, i32
  }
  func.func @transform_4(%arg0: i32) -> (i32, i32) {
    %c0_i32 = arith.constant 0 : i32
    %c0_i32_0 = arith.constant 0 : i32
    %c0_i32_1 = arith.constant 0 : i32
    return %c0_i32, %c0_i32_0 : i32, i32
  }
  func.func @transform_5(%arg0: i32) -> (i32, i32) {
    %c0_i32 = arith.constant 0 : i32
    %c0_i32_0 = arith.constant 0 : i32
    %c0_i32_1 = arith.constant 0 : i32
    return %c0_i32, %c0_i32_0 : i32, i32
  }
}

</mosaic_0001>

<llo_original>
// kernel: tpu_custom_call.1
$region0: #{tpu_custom_call.1}
  #allocation0 [shape = 'u32[]', space=smem, size = 0x4, offset = 0x4, fixed_abs, tag = 'smem constant byte address 0x4 - core index']
  #allocation1 [shape = 'u32[144,128]{1,0:T(1,128)}', space=vmem, size = 0x12000, scoped, tag = 'internal scratch']
  %s0 = inlined_call_operand.hbm [shape: f32[36], index: 0, kind: input, shape index: {}]
  %s1 = inlined_call_operand.vmem [shape: f32[2], index: 1, kind: input, shape index: {}]
  %s2 = inlined_call_operand.vmem [shape: f32[2], index: 2, kind: input, shape index: {}]
  %s3 = inlined_call_operand.vmem [shape: f32[2,256], index: 3, kind: input, shape index: {}]
  %s4 = inlined_call_operand.vmem [shape: f32[2,256], index: 4, kind: input, shape index: {}]
  %s5 = inlined_call_operand.hbm [shape: f32[2,512], index: 5, kind: output, shape index: {}]
  %s6 = sld [smem:[#allocation0]]
  $region42: #{tpu_custom_call.1} parent=0
    _
  %s8 = ssub.s32 1, %s6
  %s9 = scalar_select 0, %s8, %s6
  $region1: #{tpu_custom_call.1} parent=0
    #allocation2 [shape = 'u8[512]{0}', space=smem, size = 0x200, scoped, tag = 'input window, operand 0, single buffered']
    #allocation3 [shape = 's32[1]{0}', space=sflag, size = 0x4, scoped, tag = 'scoped memory for tpu_custom_call.1']
    #allocation4 [shape = 's32[1]{0}', space=sflag, size = 0x4, scoped, tag = 'scoped memory for tpu_custom_call.1']
    #allocation5 [shape = 's32[1]{0}', space=sflag, size = 0x4, scoped, tag = 'scoped memory for tpu_custom_call.1']
    #allocation6 [shape = 'u8[512]{0}', space=smem, size = 0x200, scoped, tag = 'input window, operand 1, single buffered']
    #allocation7 [shape = 'u8[512]{0}', space=smem, size = 0x200, scoped, tag = 'input window, operand 2, single buffered']
    #allocation8 [shape = 's32[1]{0}', space=sflag, size = 0x4, scoped, tag = 'scoped memory for tpu_custom_call.1']
    #allocation9 [shape = 'u8[4096]{0}', space=vmem, size = 0x1000, scoped, tag = 'output window, operand 0, single buffered']
    %10 = vsyncpa [#allocation4], 0
    %11 = vsyncpa [#allocation5], 0
    %12 = vsyncpa [#allocation8], 0
    %13 = vsyncpa [#allocation3], 0
    // Predicated region
    $region2: #{tpu_custom_call.1} parent=1 // pred_check
      _
    $region3: #{tpu_custom_call.1} parent=1 // pred_check_branch
      %15 = sbr.rel (0) target = $region5
    $region4: #{tpu_custom_call.1} parent=1 // pred_region
      %s17 = ssub.s32 16, 16
      %18 = vsyncadd [#allocation4], %s17
      %21 = dma.hbm_to_smem %s0, 16, [#allocation2], [#allocation4]
    $region5: #{tpu_custom_call.1} parent=1 // pred_fallthru
      _
    // Predicated region
    $region6: #{tpu_custom_call.1} parent=1 // pred_check
      _
    $region7: #{tpu_custom_call.1} parent=1 // pred_check_branch
      %23 = sbr.rel (0) target = $region9
    $region8: #{tpu_custom_call.1} parent=1 // pred_region
      %s25 = ssub.s32 16, 16
      %26 = vsyncadd [#allocation5], %s25
      %s28 = sshll.u32 %s1, 4
      %s29 = int_to_ptr.vmem [resolvable:$true] %s28
      %31 = dma.vmem_to_smem %s29, 16, [#allocation6], [#allocation5]
    $region9: #{tpu_custom_call.1} parent=1 // pred_fallthru
      _
    // Predicated region
    $region10: #{tpu_custom_call.1} parent=1 // pred_check
      _
    $region11: #{tpu_custom_call.1} parent=1 // pred_check_branch
      %33 = sbr.rel (0) target = $region13
    $region12: #{tpu_custom_call.1} parent=1 // pred_region
      %s35 = ssub.s32 16, 16
      %36 = vsyncadd [#allocation8], %s35
      %s38 = sshll.u32 %s2, 4
      %s39 = int_to_ptr.vmem [resolvable:$true] %s38
      %41 = dma.vmem_to_smem %s39, 16, [#allocation7], [#allocation8]
    $region13: #{tpu_custom_call.1} parent=1 // pred_fallthru
      _
    // Predicated region
    $region14: #{tpu_custom_call.1} parent=1 // pred_check
      _
    $region15: #{tpu_custom_call.1} parent=1 // pred_check_branch
      %43 = sbr.rel (0) target = $region17
    $region16: #{tpu_custom_call.1} parent=1 // pred_region
      _
    $region17: #{tpu_custom_call.1} parent=1 // pred_fallthru
      _
    // Predicated region
    $region18: #{tpu_custom_call.1} parent=1 // pred_check
      _
    $region19: #{tpu_custom_call.1} parent=1 // pred_check_branch
      %45 = sbr.rel (0) target = $region21
    $region20: #{tpu_custom_call.1} parent=1 // pred_region
      _
    $region21: #{tpu_custom_call.1} parent=1 // pred_fallthru
      _
    // Predicated region
    $region22: #{tpu_custom_call.1} parent=1 // pred_check
      _
    $region23: #{tpu_custom_call.1} parent=1 // pred_check_branch
      %47 = sbr.rel (0) target = $region25
    $region24: #{tpu_custom_call.1} parent=1 // pred_region
      %48 = dma.done [#allocation4], 16
    $region25: #{tpu_custom_call.1} parent=1 // pred_fallthru
      _
    // Predicated region
    $region26: #{tpu_custom_call.1} parent=1 // pred_check
      _
    $region27: #{tpu_custom_call.1} parent=1 // pred_check_branch
      %50 = sbr.rel (0) target = $region29
    $region28: #{tpu_custom_call.1} parent=1 // pred_region
      %51 = dma.done [#allocation5], 16
    $region29: #{tpu_custom_call.1} parent=1 // pred_fallthru
      _
    // Predicated region
    $region30: #{tpu_custom_call.1} parent=1 // pred_check
      _
    $region31: #{tpu_custom_call.1} parent=1 // pred_check_branch
      %53 = sbr.rel (0) target = $region33
    $region32: #{tpu_custom_call.1} parent=1 // pred_region
      %54 = dma.done [#allocation8], 16
    $region33: #{tpu_custom_call.1} parent=1 // pred_fallthru
      _
    %55 = sfence
    %v56 = vlaneseq
    %v57 = vand.u32 %v56, 127
    %v58 = vadd.s32 %v57, 128
    %vm59 = vcmp.lt.s32.totalorder %v57, 0
    %v60 = vsub.s32 0, %v57
    %v61 = vsel %vm59, %v60, %v57
    %v62 = vshrl.u32 %v61, 4
    %v63 = vand.u32 %v61, 15
    %v64 = vsub.s32 0, %v63
    %v65 = vsel %vm59, %v64, %v63
    %vm66 = vcmp.lt.s32.totalorder %v58, 0
    %v67 = vsub.s32 0, %v58
    %v68 = vsel %vm66, %v67, %v58
    %v69 = vshrl.u32 %v68, 4
    %v70 = vand.u32 %v68, 15
    %v71 = vsub.s32 0, %v70
    %v72 = vsel %vm66, %v71, %v70
    %vm73 = vcmp.ne.s32.totalorder %v65, 0
    %vm74 = vcmp.ne.s32.totalorder %v72, 0
    %vm75 = vcmp.lt.s32.totalorder %v65, 0
    %vm76 = vcmp.lt.s32.totalorder %v72, 0
    %vm77 = vmand %vm75, %vm73
    %vm78 = vmand %vm76, %vm74
    %v79 = vadd.s32 %v65, 16
    %v80 = vadd.s32 %v72, 16
    %v81 = vsel %vm77, %v79, %v65
    %v82 = vsel %vm78, %v80, %v72
    %vm83 = vcmp.ne.s32.totalorder %v81, 0
    %vm84 = vcmp.ne.s32.totalorder %v82, 0
    %vm85 = vcmp.ne.s32.totalorder %v81, 15
    %vm86 = vcmp.ne.s32.totalorder %v82, 15
    %vm87 = vcmp.ge.s32.totalorder %v57, 16
    %vm88 = vcmp.ge.s32.totalorder %v58, 16
    %vm89 = vcmp.lt.s32.totalorder %v57, 240
    %vm90 = vcmp.lt.s32.totalorder %v58, 240
    %v91 = vld [vmem:[%s3] sm:$0xf]
    %v94 = vunpack.c.l.s4 1983009808
    %v95 = vunpack.c.0.s8 %v94
    %v96 = vlaneseq
    %v97 = vshrl.u32 %v96, 7
    %v98 = vsub.s32 %v95, %v97
    %v99 = vrot.slane %v91, %v98
    %v100 = vcombine.high %v99, %v99
    %103 = vrot.lane.b32.xlu0 %v99, 1
    %v104 = vpop.permute.xlu0 %103
    %105 = vrot.lane.b32.xlu0 %v100, 1
    %v106 = vpop.permute.xlu0 %105
    %vm107 = vcmp.lt.s32.totalorder %v57, 1
    %v108 = vsel %vm107, %v104, %v106
    %v109 = vsel %vm107, %v106, %v104
    %v110 = vsel %vm83, %v109, 0.0
    %v111 = vsel %vm84, %v108, 0.0
    %112 = vrot.lane.b32.xlu0 %v99, 127
    %v113 = vpop.permute.xlu0 %112
    %114 = vrot.lane.b32.xlu0 %v100, 127
    %v115 = vpop.permute.xlu0 %114
    %vm116 = vcmp.lt.s32.totalorder %v57, 127
    %v117 = vsel %vm116, %v113, %v115
    %v118 = vsel %vm116, %v115, %v113
    %v119 = vsel %vm85, %v117, 0.0
    %v120 = vsel %vm86, %v118, 0.0
    %121 = vrot.lane.b32.xlu0 %v110, 16
    %v122 = vpop.permute.xlu0 %121
    %123 = vrot.lane.b32.xlu0 %v111, 16
    %v124 = vpop.permute.xlu0 %123
    %vm125 = vcmp.lt.s32.totalorder %v57, 16
    %v126 = vsel %vm125, %v122, %v124
    %v127 = vsel %vm125, %v124, %v122
    %s128 = sld [smem:[#allocation2]]
    %v129 = vstv %s128
    %v130 = vmul.f32 %v129, %v127
    %v131 = vmul.f32 %v129, %v126
    %s132 = sld [smem:[#allocation2 + $0x12]]
    %v133 = vstv %s132
    %v134 = vmul.f32 %v133, %v127
    %v135 = vmul.f32 %v133, %v126
    %136 = vrot.lane.b32.xlu0 %v99, 16
    %v137 = vpop.permute.xlu0 %136
    %138 = vrot.lane.b32.xlu0 %v100, 16
    %v139 = vpop.permute.xlu0 %138
    %v140 = vsel %vm125, %v137, %v139
    %v141 = vsel %vm125, %v139, %v137
    %s142 = sld [smem:[#allocation2 + $0x1]]
    %v143 = vstv %s142
    %v144 = vmul.f32 %v143, %v141
    %v145 = vmul.f32 %v143, %v140
    %s146 = sld [smem:[#allocation2 + $0x13]]
    %v147 = vstv %s146
    %v148 = vmul.f32 %v147, %v141
    %v149 = vmul.f32 %v147, %v140
    %v150 = vadd.f32 %v130, %v144
    %v151 = vadd.f32 %v131, %v145
    %v152 = vadd.f32 %v134, %v148
    %v153 = vadd.f32 %v135, %v149
    %154 = vrot.lane.b32.xlu0 %v119, 16
    %v155 = vpop.permute.xlu0 %154
    %156 = vrot.lane.b32.xlu0 %v120, 16
    %v157 = vpop.permute.xlu0 %156
    %v158 = vsel %vm125, %v155, %v157
    %v159 = vsel %vm125, %v157, %v155
    %s160 = sld [smem:[#allocation2 + $0x2]]
    %v161 = vstv %s160
    %v162 = vmul.f32 %v161, %v159
    %v163 = vmul.f32 %v161, %v158
    %s164 = sld [smem:[#allocation2 + $0x14]]
    %v165 = vstv %s164
    %v166 = vmul.f32 %v165, %v159
    %v167 = vmul.f32 %v165, %v158
    %v168 = vadd.f32 %v150, %v162
    %v169 = vadd.f32 %v151, %v163
    %v170 = vadd.f32 %v152, %v166
    %v171 = vadd.f32 %v153, %v167
    %v172 = vsel %vm87, %v168, 0.0
    %v173 = vsel %vm88, %v169, 0.0
    %v174 = vsel %vm87, %v170, 0.0
    %v175 = vsel %vm88, %v171, 0.0
    %s176 = sld [smem:[#allocation2 + $0x3]]
    %v177 = vstv %s176
    %v178 = vmul.f32 %v177, %v110
    %v179 = vmul.f32 %v177, %v111
    %s180 = sld [smem:[#allocation2 + $0x15]]
    %v181 = vstv %s180
    %v182 = vmul.f32 %v181, %v110
    %v183 = vmul.f32 %v181, %v111
    %s184 = sld [smem:[#allocation2 + $0x4]]
    %v185 = vstv %s184
    %v186 = vmul.f32 %v185, %v91
    %s187 = sld [smem:[#allocation2 + $0x16]]
    %v188 = vstv %s187
    %v189 = vmul.f32 %v188, %v91
    %v192 = vunpack.c.l.s4 1983009808
    %v193 = vunpack.c.0.s8 %v192
    %v194 = vlaneseq
    %v195 = vshrl.u32 %v194, 7
    %v196 = vsub.s32 %v193, %v195
    %v197 = vrot.slane %v186, %v196
    %v198 = vcombine.high %v197, %v197
    %v201 = vadd.f32 %v178, %v197
    %v202 = vadd.f32 %v179, %v198
    %v205 = vunpack.c.l.s4 1983009808
    %v206 = vunpack.c.0.s8 %v205
    %v207 = vlaneseq
    %v208 = vshrl.u32 %v207, 7
    %v209 = vsub.s32 %v206, %v208
    %v210 = vrot.slane %v189, %v209
    %v211 = vcombine.high %v210, %v210
    %v214 = vadd.f32 %v182, %v210
    %v215 = vadd.f32 %v183, %v211
    %s216 = sld [smem:[#allocation2 + $0x5]]
    %v217 = vstv %s216
    %v218 = vmul.f32 %v217, %v119
    %v219 = vmul.f32 %v217, %v120
    %s220 = sld [smem:[#allocation2 + $0x17]]
    %v221 = vstv %s220
    %v222 = vmul.f32 %v221, %v119
    %v223 = vmul.f32 %v221, %v120
    %v224 = vadd.f32 %v201, %v218
    %v225 = vadd.f32 %v202, %v219
    %v226 = vadd.f32 %v214, %v222
    %v227 = vadd.f32 %v215, %v223
    %v228 = vadd.f32 %v172, %v224
    %v229 = vadd.f32 %v173, %v225
    %v230 = vadd.f32 %v174, %v226
    %v231 = vadd.f32 %v175, %v227
    %232 = vrot.lane.b32.xlu0 %v110, 112
    %v233 = vpop.permute.xlu0 %232
    %234 = vrot.lane.b32.xlu0 %v111, 112
    %v235 = vpop.permute.xlu0 %234
    %vm236 = vcmp.lt.s32.totalorder %v57, 112
    %v237 = vsel %vm236, %v233, %v235
    %v238 = vsel %vm236, %v235, %v233
    %s239 = sld [smem:[#allocation2 + $0x6]]
    %v240 = vstv %s239
    %v241 = vmul.f32 %v240, %v237
    %v242 = vmul.f32 %v240, %v238
    %s243 = sld [smem:[#allocation2 + $0x18]]
    %v244 = vstv %s243
    %v245 = vmul.f32 %v244, %v237
    %v246 = vmul.f32 %v244, %v238
    %247 = vrot.lane.b32.xlu0 %v99, 112
    %v248 = vpop.permute.xlu0 %247
    %249 = vrot.lane.b32.xlu0 %v100, 112
    %v250 = vpop.permute.xlu0 %249
    %v251 = vsel %vm236, %v248, %v250
    %v252 = vsel %vm236, %v250, %v248
    %s253 = sld [smem:[#allocation2 + $0x7]]
    %v254 = vstv %s253
    %v255 = vmul.f32 %v254, %v251
    %v256 = vmul.f32 %v254, %v252
    %s257 = sld [smem:[#allocation2 + $0x19]]
    %v258 = vstv %s257
    %v259 = vmul.f32 %v258, %v251
    %v260 = vmul.f32 %v258, %v252
    %v261 = vadd.f32 %v241, %v255
    %v262 = vadd.f32 %v242, %v256
    %v263 = vadd.f32 %v245, %v259
    %v264 = vadd.f32 %v246, %v260
    %265 = vrot.lane.b32.xlu0 %v119, 112
    %v266 = vpop.permute.xlu0 %265
    %267 = vrot.lane.b32.xlu0 %v120, 112
    %v268 = vpop.permute.xlu0 %267
    %v269 = vsel %vm236, %v266, %v268
    %v270 = vsel %vm236, %v268, %v266
    %s271 = sld [smem:[#allocation2 + $0x8]]
    %v272 = vstv %s271
    %v273 = vmul.f32 %v272, %v269
    %v274 = vmul.f32 %v272, %v270
    %s275 = sld [smem:[#allocation2 + $0x1a]]
    %v276 = vstv %s275
    %v277 = vmul.f32 %v276, %v269
    %v278 = vmul.f32 %v276, %v270
    %v279 = vadd.f32 %v261, %v273
    %v280 = vadd.f32 %v262, %v274
    %v281 = vadd.f32 %v263, %v277
    %v282 = vadd.f32 %v264, %v278
    %v283 = vsel %vm89, %v279, 0.0
    %v284 = vsel %vm90, %v280, 0.0
    %v285 = vsel %vm89, %v281, 0.0
    %v286 = vsel %vm90, %v282, 0.0
    %v287 = vadd.f32 %v228, %v283
    %v288 = vadd.f32 %v229, %v284
    %v289 = vadd.f32 %v230, %v285
    %v290 = vadd.f32 %v231, %v286
    %v291 = vld [vmem:[%s4] sm:$0xf]
    %v294 = vunpack.c.l.s4 1983009808
    %v295 = vunpack.c.0.s8 %v294
    %v296 = vlaneseq
    %v297 = vshrl.u32 %v296, 7
    %v298 = vsub.s32 %v295, %v297
    %v299 = vrot.slane %v291, %v298
    %v300 = vcombine.high %v299, %v299
    %303 = vrot.lane.b32.xlu0 %v299, 1
    %v304 = vpop.permute.xlu0 %303
    %305 = vrot.lane.b32.xlu0 %v300, 1
    %v306 = vpop.permute.xlu0 %305
    %v307 = vsel %vm107, %v304, %v306
    %v308 = vsel %vm107, %v306, %v304
    %v309 = vsel %vm83, %v308, 0.0
    %v310 = vsel %vm84, %v307, 0.0
    %311 = vrot.lane.b32.xlu0 %v299, 127
    %v312 = vpop.permute.xlu0 %311
    %313 = vrot.lane.b32.xlu0 %v300, 127
    %v314 = vpop.permute.xlu0 %313
    %v315 = vsel %vm116, %v312, %v314
    %v316 = vsel %vm116, %v314, %v312
    %v317 = vsel %vm85, %v315, 0.0
    %v318 = vsel %vm86, %v316, 0.0
    %319 = vrot.lane.b32.xlu0 %v309, 16
    %v320 = vpop.permute.xlu0 %319
    %321 = vrot.lane.b32.xlu0 %v310, 16
    %v322 = vpop.permute.xlu0 %321
    %v323 = vsel %vm125, %v320, %v322
    %v324 = vsel %vm125, %v322, %v320
    %s325 = sld [smem:[#allocation2 + $0x9]]
    %v326 = vstv %s325
    %v327 = vmul.f32 %v326, %v324
    %v328 = vmul.f32 %v326, %v323
    %s329 = sld [smem:[#allocation2 + $0x1b]]
    %v330 = vstv %s329
    %v331 = vmul.f32 %v330, %v324
    %v332 = vmul.f32 %v330, %v323
    %333 = vrot.lane.b32.xlu0 %v299, 16
    %v334 = vpop.permute.xlu0 %333
    %335 = vrot.lane.b32.xlu0 %v300, 16
    %v336 = vpop.permute.xlu0 %335
    %v337 = vsel %vm125, %v334, %v336
    %v338 = vsel %vm125, %v336, %v334
    %s339 = sld [smem:[#allocation2 + $0xa]]
    %v340 = vstv %s339
    %v341 = vmul.f32 %v340, %v338
    %v342 = vmul.f32 %v340, %v337
    %s343 = sld [smem:[#allocation2 + $0x1c]]
    %v344 = vstv %s343
    %v345 = vmul.f32 %v344, %v338
    %v346 = vmul.f32 %v344, %v337
    %v347 = vadd.f32 %v327, %v341
    %v348 = vadd.f32 %v328, %v342
    %v349 = vadd.f32 %v331, %v345
    %v350 = vadd.f32 %v332, %v346
    %351 = vrot.lane.b32.xlu0 %v317, 16
    %v352 = vpop.permute.xlu0 %351
    %353 = vrot.lane.b32.xlu0 %v318, 16
    %v354 = vpop.permute.xlu0 %353
    %v355 = vsel %vm125, %v352, %v354
    %v356 = vsel %vm125, %v354, %v352
    %s357 = sld [smem:[#allocation2 + $0xb]]
    %v358 = vstv %s357
    %v359 = vmul.f32 %v358, %v356
    %v360 = vmul.f32 %v358, %v355
    %s361 = sld [smem:[#allocation2 + $0x1d]]
    %v362 = vstv %s361
    %v363 = vmul.f32 %v362, %v356
    %v364 = vmul.f32 %v362, %v355
    %v365 = vadd.f32 %v347, %v359
    %v366 = vadd.f32 %v348, %v360
    %v367 = vadd.f32 %v349, %v363
    %v368 = vadd.f32 %v350, %v364
    %v369 = vsel %vm87, %v365, 0.0
    %v370 = vsel %vm88, %v366, 0.0
    %v371 = vsel %vm87, %v367, 0.0
    %v372 = vsel %vm88, %v368, 0.0
    %v373 = vadd.f32 %v287, %v369
    %v374 = vadd.f32 %v288, %v370
    %v375 = vadd.f32 %v289, %v371
    %v376 = vadd.f32 %v290, %v372
    %s377 = sld [smem:[#allocation2 + $0xc]]
    %v378 = vstv %s377
    %v379 = vmul.f32 %v378, %v309
    %v380 = vmul.f32 %v378, %v310
    %s381 = sld [smem:[#allocation2 + $0x1e]]
    %v382 = vstv %s381
    %v383 = vmul.f32 %v382, %v309
    %v384 = vmul.f32 %v382, %v310
    %s385 = sld [smem:[#allocation2 + $0xd]]
    %v386 = vstv %s385
    %v387 = vmul.f32 %v386, %v291
    %s388 = sld [smem:[#allocation2 + $0x1f]]
    %v389 = vstv %s388
    %v390 = vmul.f32 %v389, %v291
    %v393 = vunpack.c.l.s4 1983009808
    %v394 = vunpack.c.0.s8 %v393
    %v395 = vlaneseq
    %v396 = vshrl.u32 %v395, 7
    %v397 = vsub.s32 %v394, %v396
    %v398 = vrot.slane %v387, %v397
    %v399 = vcombine.high %v398, %v398
    %v402 = vadd.f32 %v379, %v398
    %v403 = vadd.f32 %v380, %v399
    %v406 = vunpack.c.l.s4 1983009808
    %v407 = vunpack.c.0.s8 %v406
    %v408 = vlaneseq
    %v409 = vshrl.u32 %v408, 7
    %v410 = vsub.s32 %v407, %v409
    %v411 = vrot.slane %v390, %v410
    %v412 = vcombine.high %v411, %v411
    %v415 = vadd.f32 %v383, %v411
    %v416 = vadd.f32 %v384, %v412
    %s417 = sld [smem:[#allocation2 + $0xe]]
    %v418 = vstv %s417
    %v419 = vmul.f32 %v418, %v317
    %v420 = vmul.f32 %v418, %v318
    %s421 = sld [smem:[#allocation2 + $0x20]]
    %v422 = vstv %s421
    %v423 = vmul.f32 %v422, %v317
    %v424 = vmul.f32 %v422, %v318
    %v425 = vadd.f32 %v402, %v419
    %v426 = vadd.f32 %v403, %v420
    %v427 = vadd.f32 %v415, %v423
    %v428 = vadd.f32 %v416, %v424
    %v429 = vadd.f32 %v373, %v425
    %v430 = vadd.f32 %v374, %v426
    %v431 = vadd.f32 %v375, %v427
    %v432 = vadd.f32 %v376, %v428
    %433 = vrot.lane.b32.xlu0 %v309, 112
    %v434 = vpop.permute.xlu0 %433
    %435 = vrot.lane.b32.xlu0 %v310, 112
    %v436 = vpop.permute.xlu0 %435
    %v437 = vsel %vm236, %v434, %v436
    %v438 = vsel %vm236, %v436, %v434
    %s439 = sld [smem:[#allocation2 + $0xf]]
    %v440 = vstv %s439
    %v441 = vmul.f32 %v440, %v437
    %v442 = vmul.f32 %v440, %v438
    %s443 = sld [smem:[#allocation2 + $0x21]]
    %v444 = vstv %s443
    %v445 = vmul.f32 %v444, %v437
    %v446 = vmul.f32 %v444, %v438
    %447 = vrot.lane.b32.xlu0 %v299, 112
    %v448 = vpop.permute.xlu0 %447
    %449 = vrot.lane.b32.xlu0 %v300, 112
    %v450 = vpop.permute.xlu0 %449
    %v451 = vsel %vm236, %v448, %v450
    %v452 = vsel %vm236, %v450, %v448
    %s453 = sld [smem:[#allocation2 + $0x10]]
    %v454 = vstv %s453
    %v455 = vmul.f32 %v454, %v451
    %v456 = vmul.f32 %v454, %v452
    %s457 = sld [smem:[#allocation2 + $0x22]]
    %v458 = vstv %s457
    %v459 = vmul.f32 %v458, %v451
    %v460 = vmul.f32 %v458, %v452
    %v461 = vadd.f32 %v441, %v455
    %v462 = vadd.f32 %v442, %v456
    %v463 = vadd.f32 %v445, %v459
    %v464 = vadd.f32 %v446, %v460
    %465 = vrot.lane.b32.xlu0 %v317, 112
    %v466 = vpop.permute.xlu0 %465
    %467 = vrot.lane.b32.xlu0 %v318, 112
    %v468 = vpop.permute.xlu0 %467
    %v469 = vsel %vm236, %v466, %v468
    %v470 = vsel %vm236, %v468, %v466
    %s471 = sld [smem:[#allocation2 + $0x11]]
    %v472 = vstv %s471
    %v473 = vmul.f32 %v472, %v469
    %v474 = vmul.f32 %v472, %v470
    %s475 = sld [smem:[#allocation2 + $0x23]]
    %v476 = vstv %s475
    %v477 = vmul.f32 %v476, %v469
    %v478 = vmul.f32 %v476, %v470
    %v479 = vadd.f32 %v461, %v473
    %v480 = vadd.f32 %v462, %v474
    %v481 = vadd.f32 %v463, %v477
    %v482 = vadd.f32 %v464, %v478
    %v483 = vsel %vm89, %v479, 0.0
    %v484 = vsel %vm90, %v480, 0.0
    %v485 = vsel %vm89, %v481, 0.0
    %v486 = vsel %vm90, %v482, 0.0
    %v487 = vadd.f32 %v429, %v483
    %v488 = vadd.f32 %v430, %v484
    %v489 = vadd.f32 %v431, %v485
    %v490 = vadd.f32 %v432, %v486
    %vm491 = vcmask 1041408
    %v492 = vsel %vm491, %v487, 0.0
    %v493 = vsel %vm491, %v488, 0.0
    %v494 = vadd.f32 %v492, %v493
    %495 = vadd.xlane.f32.xlu0 %v494
    %v496 = vpop.xlane.xlu0 %495
    %v497 = vrot.slane %v496, 4
    %v498 = vadd.f32 %v496, %v497
    %v499 = vrot.slane %v498, 2
    %v500 = vadd.f32 %v498, %v499
    %v501 = vrot.slane %v500, 1
    %v502 = vadd.f32 %v500, %v501
    %s503 = vtos %v502
    %s504 = smul.f32 %s503, 0.001953125
    %v505 = vstv %s504
    %v506 = vsub.f32 %v487, %v505
    %v507 = vsub.f32 %v488, %v505
    %v508 = vmul.f32 %v506, %v506
    %v509 = vmul.f32 %v507, %v507
    %v510 = vsel %vm491, %v508, 0.0
    %v511 = vsel %vm491, %v509, 0.0
    %v512 = vadd.f32 %v510, %v511
    %513 = vadd.xlane.f32.xlu0 %v512
    %v514 = vpop.xlane.xlu0 %513
    %v515 = vrot.slane %v514, 4
    %v516 = vadd.f32 %v514, %v515
    %v517 = vrot.slane %v516, 2
    %v518 = vadd.f32 %v516, %v517
    %v519 = vrot.slane %v518, 1
    %v520 = vadd.f32 %v518, %v519
    %s521 = vtos %v520
    %s522 = smul.f32 %s521, 0.001953125
    %s523 = sadd.f32 %s522, 1e-05
    %v524 = vstv %s523
    %v525 = vrsqrt.pop %v524
    %s526 = vtos %v525
    %s527 = sld [smem:[#allocation6]]
    %s528 = smul.f32 %s526, %s527
    %v529 = vstv %s528
    %v530 = vmul.f32 %v506, %v529
    %v531 = vmul.f32 %v507, %v529
    %s532 = sld [smem:[#allocation7]]
    %v533 = vstv %s532
    %v534 = vadd.f32 %v530, %v533
    %v535 = vadd.f32 %v531, %v533
    %v536 = vmul.f32 %v534, 0.5
    %v537 = vmul.f32 %v535, 0.5
    %v538 = vtanh.pop %v536
    %v539 = vtanh.pop %v537
    %v540 = vmul.f32 %v538, 0.5
    %v541 = vmul.f32 %v539, 0.5
    %v542 = vadd.f32 %v540, 0.5
    %v543 = vadd.f32 %v541, 0.5
    %v546 = vcombine.low %v542, %v543
    %v548 = vunpack.c.l.s4 1983009808
    %v549 = vunpack.c.0.s8 %v548
    %v550 = vlaneseq
    %v551 = vshrl.u32 %v550, 7
    %v552 = vsub.s32 %v549, %v551
    %v553 = vrot.slane %v546, %v552
    %555 = vst [vmem:[#allocation9] sm:$0xf] %v553
    %v556 = vsel %vm491, %v489, 0.0
    %v557 = vsel %vm491, %v490, 0.0
    %v558 = vadd.f32 %v556, %v557
    %559 = vadd.xlane.f32.xlu0 %v558
    %v560 = vpop.xlane.xlu0 %559
    %v561 = vrot.slane %v560, 4
    %v562 = vadd.f32 %v560, %v561
    %v563 = vrot.slane %v562, 2
    %v564 = vadd.f32 %v562, %v563
    %v565 = vrot.slane %v564, 1
    %v566 = vadd.f32 %v564, %v565
    %s567 = vtos %v566
    %s568 = smul.f32 %s567, 0.001953125
    %v569 = vstv %s568
    %v570 = vsub.f32 %v489, %v569
    %v571 = vsub.f32 %v490, %v569
    %v572 = vmul.f32 %v570, %v570
    %v573 = vmul.f32 %v571, %v571
    %v574 = vsel %vm491, %v572, 0.0
    %v575 = vsel %vm491, %v573, 0.0
    %v576 = vadd.f32 %v574, %v575
    %577 = vadd.xlane.f32.xlu0 %v576
    %v578 = vpop.xlane.xlu0 %577
    %v579 = vrot.slane %v578, 4
    %v580 = vadd.f32 %v578, %v579
    %v581 = vrot.slane %v580, 2
    %v582 = vadd.f32 %v580, %v581
    %v583 = vrot.slane %v582, 1
    %v584 = vadd.f32 %v582, %v583
    %s585 = vtos %v584
    %s586 = smul.f32 %s585, 0.001953125
    %s587 = sadd.f32 %s586, 1e-05
    %v588 = vstv %s587
    %v589 = vrsqrt.pop %v588
    %s590 = vtos %v589
    %s591 = sld [smem:[#allocation6 + $0x1]]
    %s592 = smul.f32 %s590, %s591
    %v593 = vstv %s592
    %v594 = vmul.f32 %v570, %v593
    %v595 = vmul.f32 %v571, %v593
    %s596 = sld [smem:[#allocation7 + $0x1]]
    %v597 = vstv %s596
    %v598 = vadd.f32 %v594, %v597
    %v599 = vadd.f32 %v595, %v597
    %v600 = vmul.f32 %v598, 0.5
    %v601 = vmul.f32 %v599, 0.5
    %v602 = vtanh.pop %v600
    %v603 = vtanh.pop %v601
    %v604 = vmul.f32 %v602, 0.5
    %v605 = vmul.f32 %v603, 0.5
    %v606 = vadd.f32 %v604, 0.5
    %v607 = vadd.f32 %v605, 0.5
    %v610 = vcombine.low %v606, %v607
    %v612 = vunpack.c.l.s4 1983009808
    %v613 = vunpack.c.0.s8 %v612
    %v614 = vlaneseq
    %v615 = vshrl.u32 %v614, 7
    %v616 = vsub.s32 %v613, %v615
    %v617 = vrot.slane %v610, %v616
    %619 = vst [vmem:[#allocation9 + $0x4] sm:$0xf] %v617
    // Predicated region
    $region34: #{tpu_custom_call.1} parent=1 // pred_check
      _
    $region35: #{tpu_custom_call.1} parent=1 // pred_check_branch
      %621 = sbr.rel (0) target = $region37
    $region36: #{tpu_custom_call.1} parent=1 // pred_region
      %s623 = ssub.s32 128, 128
      %624 = vsyncadd [#allocation3], %s623
      %s626 = sshll.u32 [#allocation9], 4
      %s627 = int_to_ptr.vmem [resolvable:$true] %s626
      %629 = dma.vmem_to_hbm [thread:$0]  %s627, 128, %s5, [#allocation3]
    $region37: #{tpu_custom_call.1} parent=1 // pred_fallthru
      _
    // Predicated region
    $region38: #{tpu_custom_call.1} parent=1 // pred_check
      _
    $region39: #{tpu_custom_call.1} parent=1 // pred_check_branch
      %631 = sbr.rel (0) target = $region41
    $region40: #{tpu_custom_call.1} parent=1 // pred_region
      %632 = dma.done [#allocation3], 128
    $region41: #{tpu_custom_call.1} parent=1 // pred_fallthru
      _
    %633 = vsyncpa [#allocation3], 1
    %634 = vsyncpa [#allocation4], 1
    %635 = vsyncpa [#allocation5], 1
    %636 = vsyncpa [#allocation8], 1

</llo_original>
